<compile_context>
chip_gen: v6e
topology: v6e:2x2x1
jax: 0.10.0
libtpu: 0.0.40
codegen_flags: <defaults>
</compile_context>

<pallas_src>
import functools

import numpy as np
import jax
import jax.numpy as jnp
from jax import lax
from jax.experimental import pallas as pl
from jax.experimental.pallas import tpu as pltpu

LANES = 128          # TPU vector lane width (last dim of every tile)
BLOCK_ROWS = 2048    # int32 rows per grid step: 2048*128*4B = 1 MiB per input
NUM_SLICES = 2       # leading "parallel" grid axis -> one slice per TensorCore


def _confusion_kernel(pred_ref, label_ref, out_ref, *, num_class, cc_pad,
                      total_rows, block_rows, tiles_per_slice, apply_row_mask):
    """Accumulate per-lane confusion-matrix counts for one pixel tile.

    out_ref: (1, cc_pad, 128) int32 block, resident across the reduction axis.
    Row k (k < num_class**2) holds the per-lane partial count of cell
    (k // num_class, k % num_class).
    """
    t = pl.program_id(1)

    @pl.when(t == 0)
    def _init():
        out_ref[...] = jnp.zeros_like(out_ref)

    pred = pred_ref[...]           # (block_rows, 128) int32
    label = label_ref[...]         # (block_rows, 128) int32
    valid = (label >= 0) & (label < num_class)

    if apply_row_mask:
        # Mask (a) the unspecified rows of a ragged last tile and (b) the
        # duplicated (index-clamped) tiles of an overshooting slice.
        s = pl.program_id(0)
        row0 = (s * tiles_per_slice + t) * block_rows
        row_ids = lax.broadcasted_iota(jnp.int32, pred.shape, 0) + row0
        valid = valid & (row_ids < total_rows)

    ncc = num_class * num_class
    # Single fused key per pixel; invalid pixels get the sentinel `ncc`.
    key = jnp.where(valid, label * num_class + pred, ncc)

    # One compare + sublane (per-lane) reduction per confusion-matrix cell;
    # the expensive cross-lane reduction is deferred to the wrapper.
    # TODO(synk): for large num_class (C^2 >~ 100) replace this unrolled
    # O(C^2 * P) VPU loop with a one-hot bf16 MXU matmul.
    counts = [jnp.sum(jnp.where(key == k, 1, 0), axis=0, keepdims=True)
              for k in range(ncc)]
    if cc_pad > ncc:
        counts.append(jnp.zeros((cc_pad - ncc, key.shape[1]), jnp.int32))
    update = jnp.concatenate(counts, axis=0)        # (cc_pad, 128) int32
    out_ref[...] += update[None]                    # aligned full-block RMW


def confusion_matrix_pallas(img_predict, img_label, num_class):
    """genConfusionMatrix(imgPredict, imgLabel) on TPU.  Returns int32 (C, C)."""
    pred = jnp.asarray(img_predict).astype(jnp.int32).reshape(-1)
    label = jnp.asarray(img_label).astype(jnp.int32).reshape(-1)
    n = pred.shape[0]

    # Pad only up to the 128-lane boundary (usually a no-op for image-sized
    # inputs); padded labels are -1 and therefore fail the validity mask.
    rem = (-n) % LANES
    if rem:
        pred = jnp.pad(pred, (0, rem))
        label = jnp.pad(label, (0, rem), constant_values=-1)
    rows = (n + rem) // LANES
    pred2d = pred.reshape(rows, LANES)
    label2d = label.reshape(rows, LANES)

    block_rows = min(BLOCK_ROWS, rows)
    num_tiles = pl.cdiv(rows, block_rows)
    tiles_per_slice = pl.cdiv(num_tiles, NUM_SLICES)
    # Row-index masking is only needed when the last tile is ragged or when a
    # slice overshoots and re-reads a clamped tile.
    apply_row_mask = (rows % block_rows != 0) or \
                     (tiles_per_slice * NUM_SLICES != num_tiles)

    ncc = num_class * num_class
    cc_pad = -(-ncc // 8) * 8            # sublane-aligned output block rows

    def row_index_map(s, t):
        # Clamp so overshooting slices re-read the last in-bounds tile; their
        # contribution is discarded by the in-kernel row mask.
        return (jnp.minimum(s * tiles_per_slice + t, num_tiles - 1), 0)

    kernel = functools.partial(
        _confusion_kernel, num_class=num_class, cc_pad=cc_pad, total_rows=rows,
        block_rows=block_rows, tiles_per_slice=tiles_per_slice,
        apply_row_mask=apply_row_mask)

    partials = pl.pallas_call(
        kernel,
        out_shape=jax.ShapeDtypeStruct((NUM_SLICES, cc_pad, LANES), jnp.int32),
        grid_spec=pltpu.PrefetchScalarGridSpec(
            num_scalar_prefetch=0,
            grid=(NUM_SLICES, tiles_per_slice),
            in_specs=[
                pl.BlockSpec((block_rows, LANES), row_index_map),
                pl.BlockSpec((block_rows, LANES), row_index_map),
            ],
            out_specs=pl.BlockSpec((1, cc_pad, LANES), lambda s, t: (s, 0, 0)),
        ),
        compiler_params=pltpu.CompilerParams(
            dimension_semantics=("parallel", "arbitrary"),
            # Headroom above the 16 MiB default scoped limit on v5e; well
            # below physical VMEM on every generation (v7x: 64 MiB).
            vmem_limit_bytes=32 * 1024 * 1024,
        ),
    )(pred2d, label2d)

    # Tiny epilogue: fold per-slice, per-lane partials into the (C, C) matrix.
    cm = partials[:, :ncc, :].sum(axis=(0, 2)).reshape(num_class, num_class)
    return cm


class SegmentationMetric:
    """JAX/Pallas port of the PyTorch SegmentationMetric module.

    The per-batch confusion matrix is computed on TPU by the Pallas kernel;
    the (C, C) metric arithmetic and the float64 running confusion matrix stay
    on the host in numpy, exactly like the reference module.
    """

    def __init__(self, numClass):
        self.numClass = numClass
        self.confusionMatrix = np.zeros((numClass, numClass), dtype=np.float64)

    def pixelAccuracy(self):
        return np.diag(self.confusionMatrix).sum() / self.confusionMatrix.sum()

    def classPixelAccuracy(self):
        return np.diag(self.confusionMatrix) / self.confusionMatrix.sum(axis=1)

    def meanPixelAccuracy(self):
        return np.nanmean(self.classPixelAccuracy())

    def meanIntersectionOverUnion(self):
        intersection = np.diag(self.confusionMatrix)
        union = (self.confusionMatrix.sum(axis=1)
                 + self.confusionMatrix.sum(axis=0) - intersection)
        cIoU = intersection / union
        return cIoU, np.nanmean(cIoU)

    def genConfusionMatrix(self, imgPredict, imgLabel):
        return confusion_matrix_pallas(imgPredict, imgLabel, self.numClass)

    def reset(self):
        self.confusionMatrix = np.zeros((self.numClass, self.numClass),
                                        dtype=np.float64)

    def forward(self, imgPredict, imgLabel):
        assert imgPredict.shape == imgLabel.shape
        np.seterr(divide="ignore", invalid="ignore")
        batch_cm = self.genConfusionMatrix(imgPredict, imgLabel)   # TPU kernel
        # Exact int32 counts from the kernel, accumulated in host float64.
        self.confusionMatrix += np.asarray(jax.device_get(batch_cm),
                                           dtype=np.float64)
        pa = self.pixelAccuracy()
        cpa = self.classPixelAccuracy()
        mpa = self.meanPixelAccuracy()
        ciou, miou = self.meanIntersectionOverUnion()
        return pa, cpa, mpa, ciou, miou

    __call__ = forward


def _ref_confusion(pred, label, num_class):
    mask = (label >= 0) & (label < num_class)
    idx = num_class * label[mask] + pred[mask]
    count = np.bincount(idx, minlength=num_class ** 2)
    return count.reshape(num_class, num_class).astype(np.float64)


if __name__ == "__main__":
    num_class = 4
    shape = (2, 16, 16)               # (N, H, W) integer class maps

    key = jax.random.PRNGKey(0)
    kp, kl = jax.random.split(key)
    img_predict = jax.random.randint(kp, shape, 0, num_class, dtype=jnp.int32)
    img_label = jax.random.randint(kl, shape, 0, num_class, dtype=jnp.int32)

    # Run the Pallas kernel once and block on its result.
    batch_cm = confusion_matrix_pallas(img_predict, img_label, num_class)
    jax.block_until_ready(batch_cm)

    # Full module forward (kernel + metric arithmetic).
    metric = SegmentationMetric(num_class)
    pa, cpa, mpa, ciou, miou = metric(img_predict, img_label)

    # ---- correctness checks against the numpy reference ----
    np_pred = np.asarray(img_predict)
    np_label = np.asarray(img_label)
    ref_cm = _ref_confusion(np_pred, np_label, num_class)
    np.testing.assert_array_equal(np.asarray(batch_cm, dtype=np.float64), ref_cm)
    np.testing.assert_array_equal(metric.confusionMatrix, ref_cm)

    ref_diag = np.diag(ref_cm)
    with np.errstate(divide="ignore", invalid="ignore"):
        ref_pa = ref_diag.sum() / ref_cm.sum()
        ref_cpa = ref_diag / ref_cm.sum(axis=1)
        ref_mpa = np.nanmean(ref_cpa)
        ref_union = ref_cm.sum(axis=1) + ref_cm.sum(axis=0) - ref_diag
        ref_ciou = ref_diag / ref_union
        ref_miou = np.nanmean(ref_ciou)
    np.testing.assert_allclose(pa, ref_pa, rtol=1e-12)
    np.testing.assert_allclose(cpa, ref_cpa, rtol=1e-12)
    np.testing.assert_allclose(mpa, ref_mpa, rtol=1e-12)
    np.testing.assert_allclose(ciou, ref_ciou, rtol=1e-12)
    np.testing.assert_allclose(miou, ref_miou, rtol=1e-12)

    # Second check: exercises multiple row tiles, both grid slices and the
    # ragged-tail masking path (2*384*384 = 294912 px = 2304 rows of 128
    # -> two 2048-row tiles, the second one ragged).
    shape_b = (2, 384, 384)
    kp2, kl2 = jax.random.split(jax.random.PRNGKey(1))
    pred_b = jax.random.randint(kp2, shape_b, 0, num_class, dtype=jnp.int32)
    label_b = jax.random.randint(kl2, shape_b, 0, num_class, dtype=jnp.int32)
    cm_b = confusion_matrix_pallas(pred_b, label_b, num_class)
    jax.block_until_ready(cm_b)
    ref_cm_b = _ref_confusion(np.asarray(pred_b), np.asarray(label_b), num_class)
    np.testing.assert_array_equal(np.asarray(cm_b, dtype=np.float64), ref_cm_b)

    print("KERNEL_OK")
</pallas_src>

<mosaic_0001>
module attributes {stable_mosaic.version = 11 : i64} {
  func.func @_confusion_kernel(%arg0: i32, %arg1: i32, %arg2: memref<4x128xi32, #tpu.memory_space<vmem>>, %arg3: memref<4x128xi32, #tpu.memory_space<vmem>>, %arg4: memref<1x16x128xi32, #tpu.memory_space<vmem>>) attributes {dimension_semantics = [#tpu.dimension_semantics<parallel>, #tpu.dimension_semantics<arbitrary>], iteration_bounds = array<i64: 2, 1>, scalar_prefetch = 0 : i64, scratch_operands = 0 : i64, tpu.core_type = #tpu.core_type<tc>, window_params = [{transform_indices = @transform_0, window_bounds = array<i64: 4, 128>}, {transform_indices = @transform_1, window_bounds = array<i64: 4, 128>}, {transform_indices = @transform_2, window_bounds = array<i64: 1, 16, 128>}]} {
    %c0_i32 = arith.constant 0 : i32
    %0 = arith.cmpi eq, %arg1, %c0_i32 : i32
    %1 = arith.extui %0 : i1 to i32
    %c0_i32_0 = arith.constant 0 : i32
    %2 = arith.cmpi ne, %1, %c0_i32_0 : i32
    scf.if %2 {
      %c0_i32_64 = arith.constant 0 : i32
      %141 = vector.broadcast %c0_i32_64 : i32 to vector<1x16x128xi32>
      %c0_65 = arith.constant 0 : index
      %c0_66 = arith.constant 0 : index
      %c0_67 = arith.constant 0 : index
      %142 = vector.load %arg4[%c0_65, %c0_66, %c0_67] : memref<1x16x128xi32, #tpu.memory_space<vmem>>, vector<1x16x128xi32>
      tpu.vector_store %arg4[%c0_65, %c0_66, %c0_67], %141 {strides = array<i32>} : memref<1x16x128xi32, #tpu.memory_space<vmem>>, vector<1x16x128xi32>,
    } else {
    }
    %c0 = arith.constant 0 : index
    %c0_1 = arith.constant 0 : index
    %3 = vector.load %arg2[%c0, %c0_1] : memref<4x128xi32, #tpu.memory_space<vmem>>, vector<4x128xi32>
    %c0_2 = arith.constant 0 : index
    %c0_3 = arith.constant 0 : index
    %4 = vector.load %arg3[%c0_2, %c0_3] : memref<4x128xi32, #tpu.memory_space<vmem>>, vector<4x128xi32>
    %c0_i32_4 = arith.constant 0 : i32
    %5 = vector.broadcast %c0_i32_4 : i32 to vector<4x128xi32>
    %6 = arith.cmpi sge, %4, %5 : vector<4x128xi32>
    %c4_i32 = arith.constant 4 : i32
    %7 = vector.broadcast %c4_i32 : i32 to vector<4x128xi32>
    %8 = arith.cmpi slt, %4, %7 : vector<4x128xi32>
    %9 = arith.andi %6, %8 : vector<4x128xi1>
    %c1_i32 = arith.constant 1 : i32
    %10 = arith.muli %arg0, %c1_i32 : i32
    %11 = arith.addi %10, %arg1 : i32
    %c4_i32_5 = arith.constant 4 : i32
    %12 = arith.muli %11, %c4_i32_5 : i32
    %13 = tpu.iota {dimensions = array<i32: 0>} : vector<4x128xi32>
    %14 = vector.broadcast %12 : i32 to vector<4x128xi32>
    %15 = arith.addi %13, %14 : vector<4x128xi32>
    %c4_i32_6 = arith.constant 4 : i32
    %16 = vector.broadcast %c4_i32_6 : i32 to vector<4x128xi32>
    %17 = arith.cmpi slt, %15, %16 : vector<4x128xi32>
    %18 = arith.andi %9, %17 : vector<4x128xi1>
    %c4_i32_7 = arith.constant 4 : i32
    %19 = vector.broadcast %c4_i32_7 : i32 to vector<4x128xi32>
    %20 = arith.muli %4, %19 : vector<4x128xi32>
    %21 = arith.addi %20, %3 : vector<4x128xi32>
    %c16_i32 = arith.constant 16 : i32
    %22 = vector.broadcast %c16_i32 : i32 to vector<4x128xi32>
    %23 = arith.select %18, %21, %22 : vector<4x128xi1>, vector<4x128xi32>
    %c0_i32_8 = arith.constant 0 : i32
    %24 = vector.broadcast %c0_i32_8 : i32 to vector<4x128xi32>
    %25 = arith.cmpi eq, %23, %24 : vector<4x128xi32>
    %c1_i32_9 = arith.constant 1 : i32
    %c0_i32_10 = arith.constant 0 : i32
    %26 = vector.broadcast %c1_i32_9 : i32 to vector<4x128xi32>
    %27 = vector.broadcast %c0_i32_10 : i32 to vector<4x128xi32>
    %28 = arith.select %25, %26, %27 : vector<4x128xi1>, vector<4x128xi32>
    %cst = arith.constant dense<0> : vector<128xi32>
    %29 = vector.multi_reduction <add>, %28, %cst [0] : vector<4x128xi32> to vector<128xi32>
    %30 = vector.shape_cast %29 : vector<128xi32> to vector<1x128xi32>
    %c1_i32_11 = arith.constant 1 : i32
    %31 = vector.broadcast %c1_i32_11 : i32 to vector<4x128xi32>
    %32 = arith.cmpi eq, %23, %31 : vector<4x128xi32>
    %c1_i32_12 = arith.constant 1 : i32
    %c0_i32_13 = arith.constant 0 : i32
    %33 = vector.broadcast %c1_i32_12 : i32 to vector<4x128xi32>
    %34 = vector.broadcast %c0_i32_13 : i32 to vector<4x128xi32>
    %35 = arith.select %32, %33, %34 : vector<4x128xi1>, vector<4x128xi32>
    %cst_14 = arith.constant dense<0> : vector<128xi32>
    %36 = vector.multi_reduction <add>, %35, %cst_14 [0] : vector<4x128xi32> to vector<128xi32>
    %37 = vector.shape_cast %36 : vector<128xi32> to vector<1x128xi32>
    %c2_i32 = arith.constant 2 : i32
    %38 = vector.broadcast %c2_i32 : i32 to vector<4x128xi32>
    %39 = arith.cmpi eq, %23, %38 : vector<4x128xi32>
    %c1_i32_15 = arith.constant 1 : i32
    %c0_i32_16 = arith.constant 0 : i32
    %40 = vector.broadcast %c1_i32_15 : i32 to vector<4x128xi32>
    %41 = vector.broadcast %c0_i32_16 : i32 to vector<4x128xi32>
    %42 = arith.select %39, %40, %41 : vector<4x128xi1>, vector<4x128xi32>
    %cst_17 = arith.constant dense<0> : vector<128xi32>
    %43 = vector.multi_reduction <add>, %42, %cst_17 [0] : vector<4x128xi32> to vector<128xi32>
    %44 = vector.shape_cast %43 : vector<128xi32> to vector<1x128xi32>
    %c3_i32 = arith.constant 3 : i32
    %45 = vector.broadcast %c3_i32 : i32 to vector<4x128xi32>
    %46 = arith.cmpi eq, %23, %45 : vector<4x128xi32>
    %c1_i32_18 = arith.constant 1 : i32
    %c0_i32_19 = arith.constant 0 : i32
    %47 = vector.broadcast %c1_i32_18 : i32 to vector<4x128xi32>
    %48 = vector.broadcast %c0_i32_19 : i32 to vector<4x128xi32>
    %49 = arith.select %46, %47, %48 : vector<4x128xi1>, vector<4x128xi32>
    %cst_20 = arith.constant dense<0> : vector<128xi32>
    %50 = vector.multi_reduction <add>, %49, %cst_20 [0] : vector<4x128xi32> to vector<128xi32>
    %51 = vector.shape_cast %50 : vector<128xi32> to vector<1x128xi32>
    %c4_i32_21 = arith.constant 4 : i32
    %52 = vector.broadcast %c4_i32_21 : i32 to vector<4x128xi32>
    %53 = arith.cmpi eq, %23, %52 : vector<4x128xi32>
    %c1_i32_22 = arith.constant 1 : i32
    %c0_i32_23 = arith.constant 0 : i32
    %54 = vector.broadcast %c1_i32_22 : i32 to vector<4x128xi32>
    %55 = vector.broadcast %c0_i32_23 : i32 to vector<4x128xi32>
    %56 = arith.select %53, %54, %55 : vector<4x128xi1>, vector<4x128xi32>
    %cst_24 = arith.constant dense<0> : vector<128xi32>
    %57 = vector.multi_reduction <add>, %56, %cst_24 [0] : vector<4x128xi32> to vector<128xi32>
    %58 = vector.shape_cast %57 : vector<128xi32> to vector<1x128xi32>
    %c5_i32 = arith.constant 5 : i32
    %59 = vector.broadcast %c5_i32 : i32 to vector<4x128xi32>
    %60 = arith.cmpi eq, %23, %59 : vector<4x128xi32>
    %c1_i32_25 = arith.constant 1 : i32
    %c0_i32_26 = arith.constant 0 : i32
    %61 = vector.broadcast %c1_i32_25 : i32 to vector<4x128xi32>
    %62 = vector.broadcast %c0_i32_26 : i32 to vector<4x128xi32>
    %63 = arith.select %60, %61, %62 : vector<4x128xi1>, vector<4x128xi32>
    %cst_27 = arith.constant dense<0> : vector<128xi32>
    %64 = vector.multi_reduction <add>, %63, %cst_27 [0] : vector<4x128xi32> to vector<128xi32>
    %65 = vector.shape_cast %64 : vector<128xi32> to vector<1x128xi32>
    %c6_i32 = arith.constant 6 : i32
    %66 = vector.broadcast %c6_i32 : i32 to vector<4x128xi32>
    %67 = arith.cmpi eq, %23, %66 : vector<4x128xi32>
    %c1_i32_28 = arith.constant 1 : i32
    %c0_i32_29 = arith.constant 0 : i32
    %68 = vector.broadcast %c1_i32_28 : i32 to vector<4x128xi32>
    %69 = vector.broadcast %c0_i32_29 : i32 to vector<4x128xi32>
    %70 = arith.select %67, %68, %69 : vector<4x128xi1>, vector<4x128xi32>
    %cst_30 = arith.constant dense<0> : vector<128xi32>
    %71 = vector.multi_reduction <add>, %70, %cst_30 [0] : vector<4x128xi32> to vector<128xi32>
    %72 = vector.shape_cast %71 : vector<128xi32> to vector<1x128xi32>
    %c7_i32 = arith.constant 7 : i32
    %73 = vector.broadcast %c7_i32 : i32 to vector<4x128xi32>
    %74 = arith.cmpi eq, %23, %73 : vector<4x128xi32>
    %c1_i32_31 = arith.constant 1 : i32
    %c0_i32_32 = arith.constant 0 : i32
    %75 = vector.broadcast %c1_i32_31 : i32 to vector<4x128xi32>
    %76 = vector.broadcast %c0_i32_32 : i32 to vector<4x128xi32>
    %77 = arith.select %74, %75, %76 : vector<4x128xi1>, vector<4x128xi32>
    %cst_33 = arith.constant dense<0> : vector<128xi32>
    %78 = vector.multi_reduction <add>, %77, %cst_33 [0] : vector<4x128xi32> to vector<128xi32>
    %79 = vector.shape_cast %78 : vector<128xi32> to vector<1x128xi32>
    %c8_i32 = arith.constant 8 : i32
    %80 = vector.broadcast %c8_i32 : i32 to vector<4x128xi32>
    %81 = arith.cmpi eq, %23, %80 : vector<4x128xi32>
    %c1_i32_34 = arith.constant 1 : i32
    %c0_i32_35 = arith.constant 0 : i32
    %82 = vector.broadcast %c1_i32_34 : i32 to vector<4x128xi32>
    %83 = vector.broadcast %c0_i32_35 : i32 to vector<4x128xi32>
    %84 = arith.select %81, %82, %83 : vector<4x128xi1>, vector<4x128xi32>
    %cst_36 = arith.constant dense<0> : vector<128xi32>
    %85 = vector.multi_reduction <add>, %84, %cst_36 [0] : vector<4x128xi32> to vector<128xi32>
    %86 = vector.shape_cast %85 : vector<128xi32> to vector<1x128xi32>
    %c9_i32 = arith.constant 9 : i32
    %87 = vector.broadcast %c9_i32 : i32 to vector<4x128xi32>
    %88 = arith.cmpi eq, %23, %87 : vector<4x128xi32>
    %c1_i32_37 = arith.constant 1 : i32
    %c0_i32_38 = arith.constant 0 : i32
    %89 = vector.broadcast %c1_i32_37 : i32 to vector<4x128xi32>
    %90 = vector.broadcast %c0_i32_38 : i32 to vector<4x128xi32>
    %91 = arith.select %88, %89, %90 : vector<4x128xi1>, vector<4x128xi32>
    %cst_39 = arith.constant dense<0> : vector<128xi32>
    %92 = vector.multi_reduction <add>, %91, %cst_39 [0] : vector<4x128xi32> to vector<128xi32>
    %93 = vector.shape_cast %92 : vector<128xi32> to vector<1x128xi32>
    %c10_i32 = arith.constant 10 : i32
    %94 = vector.broadcast %c10_i32 : i32 to vector<4x128xi32>
    %95 = arith.cmpi eq, %23, %94 : vector<4x128xi32>
    %c1_i32_40 = arith.constant 1 : i32
    %c0_i32_41 = arith.constant 0 : i32
    %96 = vector.broadcast %c1_i32_40 : i32 to vector<4x128xi32>
    %97 = vector.broadcast %c0_i32_41 : i32 to vector<4x128xi32>
    %98 = arith.select %95, %96, %97 : vector<4x128xi1>, vector<4x128xi32>
    %cst_42 = arith.constant dense<0> : vector<128xi32>
    %99 = vector.multi_reduction <add>, %98, %cst_42 [0] : vector<4x128xi32> to vector<128xi32>
    %100 = vector.shape_cast %99 : vector<128xi32> to vector<1x128xi32>
    %c11_i32 = arith.constant 11 : i32
    %101 = vector.broadcast %c11_i32 : i32 to vector<4x128xi32>
    %102 = arith.cmpi eq, %23, %101 : vector<4x128xi32>
    %c1_i32_43 = arith.constant 1 : i32
    %c0_i32_44 = arith.constant 0 : i32
    %103 = vector.broadcast %c1_i32_43 : i32 to vector<4x128xi32>
    %104 = vector.broadcast %c0_i32_44 : i32 to vector<4x128xi32>
    %105 = arith.select %102, %103, %104 : vector<4x128xi1>, vector<4x128xi32>
    %cst_45 = arith.constant dense<0> : vector<128xi32>
    %106 = vector.multi_reduction <add>, %105, %cst_45 [0] : vector<4x128xi32> to vector<128xi32>
    %107 = vector.shape_cast %106 : vector<128xi32> to vector<1x128xi32>
    %c12_i32 = arith.constant 12 : i32
    %108 = vector.broadcast %c12_i32 : i32 to vector<4x128xi32>
    %109 = arith.cmpi eq, %23, %108 : vector<4x128xi32>
    %c1_i32_46 = arith.constant 1 : i32
    %c0_i32_47 = arith.constant 0 : i32
    %110 = vector.broadcast %c1_i32_46 : i32 to vector<4x128xi32>
    %111 = vector.broadcast %c0_i32_47 : i32 to vector<4x128xi32>
    %112 = arith.select %109, %110, %111 : vector<4x128xi1>, vector<4x128xi32>
    %cst_48 = arith.constant dense<0> : vector<128xi32>
    %113 = vector.multi_reduction <add>, %112, %cst_48 [0] : vector<4x128xi32> to vector<128xi32>
    %114 = vector.shape_cast %113 : vector<128xi32> to vector<1x128xi32>
    %c13_i32 = arith.constant 13 : i32
    %115 = vector.broadcast %c13_i32 : i32 to vector<4x128xi32>
    %116 = arith.cmpi eq, %23, %115 : vector<4x128xi32>
    %c1_i32_49 = arith.constant 1 : i32
    %c0_i32_50 = arith.constant 0 : i32
    %117 = vector.broadcast %c1_i32_49 : i32 to vector<4x128xi32>
    %118 = vector.broadcast %c0_i32_50 : i32 to vector<4x128xi32>
    %119 = arith.select %116, %117, %118 : vector<4x128xi1>, vector<4x128xi32>
    %cst_51 = arith.constant dense<0> : vector<128xi32>
    %120 = vector.multi_reduction <add>, %119, %cst_51 [0] : vector<4x128xi32> to vector<128xi32>
    %121 = vector.shape_cast %120 : vector<128xi32> to vector<1x128xi32>
    %c14_i32 = arith.constant 14 : i32
    %122 = vector.broadcast %c14_i32 : i32 to vector<4x128xi32>
    %123 = arith.cmpi eq, %23, %122 : vector<4x128xi32>
    %c1_i32_52 = arith.constant 1 : i32
    %c0_i32_53 = arith.constant 0 : i32
    %124 = vector.broadcast %c1_i32_52 : i32 to vector<4x128xi32>
    %125 = vector.broadcast %c0_i32_53 : i32 to vector<4x128xi32>
    %126 = arith.select %123, %124, %125 : vector<4x128xi1>, vector<4x128xi32>
    %cst_54 = arith.constant dense<0> : vector<128xi32>
    %127 = vector.multi_reduction <add>, %126, %cst_54 [0] : vector<4x128xi32> to vector<128xi32>
    %128 = vector.shape_cast %127 : vector<128xi32> to vector<1x128xi32>
    %c15_i32 = arith.constant 15 : i32
    %129 = vector.broadcast %c15_i32 : i32 to vector<4x128xi32>
    %130 = arith.cmpi eq, %23, %129 : vector<4x128xi32>
    %c1_i32_55 = arith.constant 1 : i32
    %c0_i32_56 = arith.constant 0 : i32
    %131 = vector.broadcast %c1_i32_55 : i32 to vector<4x128xi32>
    %132 = vector.broadcast %c0_i32_56 : i32 to vector<4x128xi32>
    %133 = arith.select %130, %131, %132 : vector<4x128xi1>, vector<4x128xi32>
    %cst_57 = arith.constant dense<0> : vector<128xi32>
    %134 = vector.multi_reduction <add>, %133, %cst_57 [0] : vector<4x128xi32> to vector<128xi32>
    %135 = vector.shape_cast %134 : vector<128xi32> to vector<1x128xi32>
    %136 = tpu.concatenate %30, %37, %44, %51, %58, %65, %72, %79, %86, %93, %100, %107, %114, %121, %128, %135 in 0 : vector<1x128xi32>, vector<1x128xi32>, vector<1x128xi32>, vector<1x128xi32>, vector<1x128xi32>, vector<1x128xi32>, vector<1x128xi32>, vector<1x128xi32>, vector<1x128xi32>, vector<1x128xi32>, vector<1x128xi32>, vector<1x128xi32>, vector<1x128xi32>, vector<1x128xi32>, vector<1x128xi32>, vector<1x128xi32> -> vector<16x128xi32>
    %c0_58 = arith.constant 0 : index
    %c0_59 = arith.constant 0 : index
    %c0_60 = arith.constant 0 : index
    %137 = vector.load %arg4[%c0_58, %c0_59, %c0_60] : memref<1x16x128xi32, #tpu.memory_space<vmem>>, vector<1x16x128xi32>
    %138 = vector.shape_cast %136 : vector<16x128xi32> to vector<1x16x128xi32>
    %139 = arith.addi %137, %138 : vector<1x16x128xi32>
    %c0_61 = arith.constant 0 : index
    %c0_62 = arith.constant 0 : index
    %c0_63 = arith.constant 0 : index
    %140 = vector.load %arg4[%c0_61, %c0_62, %c0_63] : memref<1x16x128xi32, #tpu.memory_space<vmem>>, vector<1x16x128xi32>
    tpu.vector_store %arg4[%c0_61, %c0_62, %c0_63], %139 {strides = array<i32>} : memref<1x16x128xi32, #tpu.memory_space<vmem>>, vector<1x16x128xi32>,
    return
  }
  func.func @transform_0(%arg0: i32, %arg1: i32) -> (i32, i32) {
    %c1_i32 = arith.constant 1 : i32
    %0 = arith.muli %arg0, %c1_i32 : i32
    %1 = arith.addi %0, %arg1 : i32
    %c0_i32 = arith.constant 0 : i32
    %2 = arith.minsi %1, %c0_i32 : i32
    %c0_i32_0 = arith.constant 0 : i32
    %c0_i32_1 = arith.constant 0 : i32
    return %2, %c0_i32_0 : i32, i32
  }
  func.func @transform_1(%arg0: i32, %arg1: i32) -> (i32, i32) {
    %c1_i32 = arith.constant 1 : i32
    %0 = arith.muli %arg0, %c1_i32 : i32
    %1 = arith.addi %0, %arg1 : i32
    %c0_i32 = arith.constant 0 : i32
    %2 = arith.minsi %1, %c0_i32 : i32
    %c0_i32_0 = arith.constant 0 : i32
    %c0_i32_1 = arith.constant 0 : i32
    return %2, %c0_i32_0 : i32, i32
  }
  func.func @transform_2(%arg0: i32, %arg1: i32) -> (i32, i32, i32) {
    %c0_i32 = arith.constant 0 : i32
    %c0_i32_0 = arith.constant 0 : i32
    %c0_i32_1 = arith.constant 0 : i32
    return %arg0, %c0_i32, %c0_i32_0 : i32, i32, i32
  }
}

</mosaic_0001>

<llo_original>
// kernel: tpu_custom_call.1
$region0: #{tpu_custom_call.1}
  #allocation0 [shape = 'u32[]', space=smem, size = 0x4, offset = 0x4, fixed_abs, tag = 'smem constant byte address 0x4 - core index']
  #allocation1 [shape = 'u32[144,128]{1,0:T(1,128)}', space=vmem, size = 0x12000, scoped, tag = 'internal scratch']
  %s0 = inlined_call_operand.hbm [shape: s32[4,128], index: 0, kind: input, shape index: {}]
  %s1 = inlined_call_operand.hbm [shape: s32[4,128], index: 1, kind: input, shape index: {}]
  %s2 = inlined_call_operand.hbm [shape: s32[2,16,128], index: 2, kind: output, shape index: {}]
  %s3 = sld [smem:[#allocation0]]
  $region53: #{tpu_custom_call.1} parent=0
    _
  %s5 = ssub.s32 1, %s3
  %s6 = scalar_select 0, %s5, %s3
  $region1: #{tpu_custom_call.1} parent=0
    #allocation2 [shape = 'u8[4096]{0}', space=vmem, size = 0x1000, scoped, tag = 'input window, operand 0']
    #allocation3 [shape = 's32[2]{0}', space=sflag, size = 0x8, scoped, tag = 'scoped memory for tpu_custom_call.1']
    #allocation4 [shape = 's32[2]{0}', space=sflag, size = 0x8, scoped, tag = 'scoped memory for tpu_custom_call.1']
    #allocation5 [shape = 'u8[4096]{0}', space=vmem, size = 0x1000, scoped, tag = 'input window, operand 1']
    #allocation6 [shape = 's32[2]{0}', space=sflag, size = 0x8, scoped, tag = 'scoped memory for tpu_custom_call.1']
    #allocation7 [shape = 'u8[16384]{0}', space=vmem, size = 0x4000, scoped, tag = 'output window, operand 0']
    %7 = vsyncpa [#allocation3], 0
    %s8 = scalar_lea.sflag [#allocation3], 1
    %9 = vsyncpa %s8, 0
    %10 = vsyncpa [#allocation6], 0
    %s11 = scalar_lea.sflag [#allocation6], 1
    %12 = vsyncpa %s11, 0
    %13 = vsyncpa [#allocation4], 0
    %s14 = scalar_lea.sflag [#allocation4], 1
    %15 = vsyncpa %s14, 0
    loop: start=0, step=1, limit=4
    $region2: #{tpu_custom_call.1} parent=1 // loop_pre_header
      _
    $region3: #{tpu_custom_call.1} parent=1 // loop_header
      %s17 = sphi 0, %s21
      %p18 = scmp.ge.s32.totalorder %s17, 4
      %s24 = sphi 0, %s36
      %s25 = sphi 0, %s32
      %s26 = sphi 0, %s24
      %s27 = sphi 0, %s25
      %s28 = sphi 0, %s26
      %s29 = sphi 0, %s27
      %s45 = sphi 0, %s47
      %s48 = sphi 0, %s45
      %s49 = sphi 0, %s48
      %s65 = sphi 0, %s49
      %s77 = sphi 0, %s79
      %s80 = sphi 0, %s77
      %s81 = sphi 0, %s80
      %s97 = sphi 0, %s81
      %s103 = sphi 0, %s105
      %s106 = sphi 0, %s103
      %s107 = sphi 0, %s106
      %s123 = sphi 0, %s107
    $region4: #{tpu_custom_call.1} parent=1 // loop_header_branch
      %20 = sbr.rel (%p18) target = $region8
    $region5: #{tpu_custom_call.1} parent=1 // loop_body
      %s22 = ssub.s32 %s17, 1
      %s23 = ssub.s32 %s17, 2
      %s30 = sadd.s32 1, %s25
      %p31 = scmp.ge.s32.totalorder %s30, 1
      %s32 = scalar_select %p31, 0, %s30
      %s33 = sadd.s32 1, %s24
      %s34 = scalar_select %p31, %s33, %s24
      %p35 = scmp.ge.s32.totalorder %s34, 2
      %s36 = scalar_select %p35, 0, %s34
      %s37 = sadd.s32 %s24, %s25
      %p38 = scmp.lt.s32.totalorder %s37, 0
      %s39 = scalar_select %p38, %s37, 0
      %s40 = sadd.s32 %s36, %s32
      %p41 = scmp.lt.s32.totalorder %s40, 0
      %s42 = scalar_select %p41, %s40, 0
      %s43 = ssub.s32 %s39, %s42
      %p44 = scmp.eq.s32.totalorder %s43, 0
      %s46 = sadd.s32 %s45, 1
      %s47 = scalar_select %p44, %s45, %s46
      %p50 = pneg %p44
      %p51 = scmp.eq.s32.totalorder %s17, 1
      %p52 = por %p50, %p51
      %p53 = scmp.ne.s32.totalorder %s45, %s48
      %p54 = scmp.eq.s32.totalorder %s17, 0
      %p55 = por %p53, %p54
      %p56 = scmp.ne.s32.totalorder %s45, %s48
      %p57 = scmp.eq.s32.totalorder %s22, 1
      %p58 = por %p56, %p57
      %p59 = scmp.ne.s32.totalorder %s48, %s49
      %p60 = scmp.eq.s32.totalorder %s22, 0
      %p61 = por %p59, %p60
      %p62 = scmp.ne.s32.totalorder %s48, %s49
      %p63 = scmp.eq.s32.totalorder %s23, 1
      %p64 = por %p62, %p63
      %p66 = scmp.ne.s32.totalorder %s49, %s65
      %p67 = scmp.eq.s32.totalorder %s23, 0
      %p68 = por %p66, %p67
      %s69 = sadd.s32 %s24, %s25
      %p70 = scmp.lt.s32.totalorder %s69, 0
      %s71 = scalar_select %p70, %s69, 0
      %s72 = sadd.s32 %s36, %s32
      %p73 = scmp.lt.s32.totalorder %s72, 0
      %s74 = scalar_select %p73, %s72, 0
      %s75 = ssub.s32 %s71, %s74
      %p76 = scmp.eq.s32.totalorder %s75, 0
      %s78 = sadd.s32 %s77, 1
      %s79 = scalar_select %p76, %s77, %s78
      %p82 = pneg %p76
      %p83 = scmp.eq.s32.totalorder %s17, 1
      %p84 = por %p82, %p83
      %p85 = scmp.ne.s32.totalorder %s77, %s80
      %p86 = scmp.eq.s32.totalorder %s17, 0
      %p87 = por %p85, %p86
      %p88 = scmp.ne.s32.totalorder %s77, %s80
      %p89 = scmp.eq.s32.totalorder %s22, 1
      %p90 = por %p88, %p89
      %p91 = scmp.ne.s32.totalorder %s80, %s81
      %p92 = scmp.eq.s32.totalorder %s22, 0
      %p93 = por %p91, %p92
      %p94 = scmp.ne.s32.totalorder %s80, %s81
      %p95 = scmp.eq.s32.totalorder %s23, 1
      %p96 = por %p94, %p95
      %p98 = scmp.ne.s32.totalorder %s81, %s97
      %p99 = scmp.eq.s32.totalorder %s23, 0
      %p100 = por %p98, %p99
      %s101 = ssub.s32 %s24, %s36
      %p102 = scmp.eq.s32.totalorder %s101, 0
      %s104 = sadd.s32 %s103, 1
      %s105 = scalar_select %p102, %s103, %s104
      %p108 = pneg %p102
      %p109 = scmp.eq.s32.totalorder %s17, 1
      %p110 = por %p108, %p109
      %p111 = scmp.ne.s32.totalorder %s103, %s106
      %p112 = scmp.eq.s32.totalorder %s17, 0
      %p113 = por %p111, %p112
      %p114 = scmp.ne.s32.totalorder %s103, %s106
      %p115 = scmp.eq.s32.totalorder %s22, 1
      %p116 = por %p114, %p115
      %p117 = scmp.ne.s32.totalorder %s106, %s107
      %p118 = scmp.eq.s32.totalorder %s22, 0
      %p119 = por %p117, %p118
      %p120 = scmp.ne.s32.totalorder %s106, %s107
      %p121 = scmp.eq.s32.totalorder %s23, 1
      %p122 = por %p120, %p121
      %p124 = scmp.ne.s32.totalorder %s107, %s123
      %p125 = scmp.eq.s32.totalorder %s23, 0
      %p126 = por %p124, %p125
      %p127 = scmp.le.s32.totalorder 1, %s17
      %p128 = scmp.lt.s32.totalorder %s17, 3
      %p129 = pnand %p127, %p128
      %p130 = pneg %p129
      // Predicated region
      $region9: #{tpu_custom_call.1} parent=5 // pred_check
        _
      $region10: #{tpu_custom_call.1} parent=5 // pred_check_branch
        %132 = sbr.rel (%p129) target = $region12
      $region11: #{tpu_custom_call.1} parent=5 // pred_region
        %s133 = ssub.s32 %s17, 1
      $region12: #{tpu_custom_call.1} parent=5 // pred_fallthru
        _
      %p134 = scmp.lt.s32.totalorder %s17, 2
      // Predicated region
      $region13: #{tpu_custom_call.1} parent=5 // pred_check
        %p135 = pneg %p134
      $region14: #{tpu_custom_call.1} parent=5 // pred_check_branch
        %137 = sbr.rel (%p135) target = $region16
      $region15: #{tpu_custom_call.1} parent=5 // pred_region
        // Predicated region
        $region17: #{tpu_custom_call.1} parent=15 // pred_check
          %p138 = pneg %p55
        $region18: #{tpu_custom_call.1} parent=15 // pred_check_branch
          %140 = sbr.rel (%p138) target = $region20
        $region19: #{tpu_custom_call.1} parent=15 // pred_region
          %s141 = sand.u32 %s45, 1
          %s142 = scalar_lea.sflag [#allocation3], %s141
          %s143 = sand.u32 %s45, 1
          %s144 = smul.addr %s143, 4
          %s145 = scalar_lea.vmem [#allocation2], %s144
          %s146 = sadd.s32 %s24, %s25
          %p147 = scmp.lt.s32.totalorder %s146, 0
          %s148 = scalar_select %p147, %s146, 0
          %s150 = ssub.s32 64, 64
          %151 = vsyncadd %s142, %s150
          %s152 = smul.addr %s148, 64
          %s153 = scalar_lea.hbm %s0, %s152
          %s155 = sshll.u32 %s145, 4
          %s156 = int_to_ptr.vmem [resolvable:$true] %s155
          %158 = dma.hbm_to_vmem [thread:$0]  %s153, 64, %s156, %s142
        $region20: #{tpu_custom_call.1} parent=15 // pred_fallthru
          _
        // Predicated region
        $region21: #{tpu_custom_call.1} parent=15 // pred_check
          %p159 = pneg %p87
        $region22: #{tpu_custom_call.1} parent=15 // pred_check_branch
          %161 = sbr.rel (%p159) target = $region24
        $region23: #{tpu_custom_call.1} parent=15 // pred_region
          %s162 = sand.u32 %s77, 1
          %s163 = scalar_lea.sflag [#allocation6], %s162
          %s164 = sand.u32 %s77, 1
          %s165 = smul.addr %s164, 4
          %s166 = scalar_lea.vmem [#allocation5], %s165
          %s167 = sadd.s32 %s24, %s25
          %p168 = scmp.lt.s32.totalorder %s167, 0
          %s169 = scalar_select %p168, %s167, 0
          %s171 = ssub.s32 64, 64
          %172 = vsyncadd %s163, %s171
          %s173 = smul.addr %s169, 64
          %s174 = scalar_lea.hbm %s1, %s173
          %s176 = sshll.u32 %s166, 4
          %s177 = int_to_ptr.vmem [resolvable:$true] %s176
          %179 = dma.hbm_to_vmem [thread:$0]  %s174, 64, %s177, %s163
        $region24: #{tpu_custom_call.1} parent=15 // pred_fallthru
          _
      $region16: #{tpu_custom_call.1} parent=5 // pred_fallthru
        _
      %p180 = scmp.le.s32.totalorder 1, %s17
      %p181 = scmp.lt.s32.totalorder %s17, 3
      %p182 = pnand %p180, %p181
      %p183 = pneg %p182
      // Predicated region
      $region25: #{tpu_custom_call.1} parent=5 // pred_check
        _
      $region26: #{tpu_custom_call.1} parent=5 // pred_check_branch
        %185 = sbr.rel (%p182) target = $region28
      $region27: #{tpu_custom_call.1} parent=5 // pred_region
        %s186 = ssub.s32 %s17, 1
        %s187 = sand.u32 %s48, 1
        %s188 = scalar_lea.sflag [#allocation3], %s187
        %s189 = sand.u32 %s48, 1
        %s190 = smul.addr %s189, 4
        %s191 = scalar_lea.vmem [#allocation2], %s190
        // Predicated region
        $region29: #{tpu_custom_call.1} parent=27 // pred_check
          %p192 = pneg %p61
        $region30: #{tpu_custom_call.1} parent=27 // pred_check_branch
          %194 = sbr.rel (%p192) target = $region32
        $region31: #{tpu_custom_call.1} parent=27 // pred_region
          %195 = dma.done %s188, 64
        $region32: #{tpu_custom_call.1} parent=27 // pred_fallthru
          _
        %s196 = sand.u32 %s80, 1
        %s197 = scalar_lea.sflag [#allocation6], %s196
        %s198 = sand.u32 %s80, 1
        %s199 = smul.addr %s198, 4
        %s200 = scalar_lea.vmem [#allocation5], %s199
        // Predicated region
        $region33: #{tpu_custom_call.1} parent=27 // pred_check
          %p201 = pneg %p93
        $region34: #{tpu_custom_call.1} parent=27 // pred_check_branch
          %203 = sbr.rel (%p201) target = $region36
        $region35: #{tpu_custom_call.1} parent=27 // pred_region
          %204 = dma.done %s197, 64
        $region36: #{tpu_custom_call.1} parent=27 // pred_fallthru
          _
        %s205 = sand.u32 %s48, 1
        %s206 = scalar_lea.sflag [#allocation3], %s205
        %s207 = sand.u32 %s48, 1
        %s208 = smul.addr %s207, 4
        %s209 = scalar_lea.vmem [#allocation2], %s208
        %p210 = pneg %p61
        %p211 = pneg %p58
        %s212 = sand.u32 %s80, 1
        %s213 = scalar_lea.sflag [#allocation6], %s212
        %s214 = sand.u32 %s80, 1
        %s215 = smul.addr %s214, 4
        %s216 = scalar_lea.vmem [#allocation5], %s215
        %p217 = pneg %p93
        %p218 = pneg %p90
        %p219 = pneg %p119
        %p220 = pneg %p116
        %s221 = sand.u32 %s106, 1
        %s222 = scalar_lea.sflag [#allocation4], %s221
        %s223 = sand.u32 %s106, 1
        %s224 = smul.addr %s223, 16
        %s225 = scalar_lea.vmem [#allocation7], %s224
        %s226 = sadd.s32 %s26, %s27
        %p227 = scmp.lt.s32.totalorder %s226, 0
        %s228 = scalar_select %p227, %s226, 0
        %s229 = sadd.s32 %s26, %s27
        %p230 = scmp.lt.s32.totalorder %s229, 0
        %s231 = scalar_select %p230, %s229, 0
        %p232 = scmp.eq.s32.totalorder %s27, 0
        // Predicated region
        $region37: #{tpu_custom_call.1} parent=27 // pred_check
          %p233 = pneg %p232
        $region38: #{tpu_custom_call.1} parent=27 // pred_check_branch
          %235 = sbr.rel (%p233) target = $region40
        $region39: #{tpu_custom_call.1} parent=27 // pred_region
          %236 = vst [vmem:[%s225] sm:$0xff] 0
          %237 = vst [vmem:[%s225 + $0x8] sm:$0xff] 0
        $region40: #{tpu_custom_call.1} parent=27 // pred_fallthru
          _
        %v238 = vld [vmem:[%s191] sm:$0xf]
        %v239 = vld [vmem:[%s200] sm:$0xf]
        %vm240 = vcmp.ge.s32.totalorder %v239, 0
        %vm241 = vcmp.lt.s32.totalorder %v239, 4
        %vm242 = vmand %vm240, %vm241
        %s243 = sadd.s32 %s26, %s27
        %s244 = smul.u32 %s243, 4
        %v245 = vlaneseq
        %v246 = vshrl.u32 %v245, 7
        %v247 = vstv %s244
        %v248 = vadd.s32 %v246, %v247
        %vm249 = vcmp.lt.s32.totalorder %v248, 4
        %vm250 = vmand %vm242, %vm249
        %v251 = vmul.u32 %v239, 4
        %v252 = vadd.s32 %v251, %v238
        %v253 = vsel %vm250, %v252, 16
        %vm254 = vcmp.eq.s32.totalorder %v253, 0
        %v255 = vsel %vm254, 1, 0
        %vm256 = vcmask 1043456
        %v257 = vsel %vm256, %v255, 0
        %v258 = vrot.slane %v257, 4
        %v259 = vadd.s32 %v257, %v258
        %v260 = vrot.slane %v259, 2
        %v261 = vadd.s32 %v259, %v260
        %v262 = vrot.slane %v261, 1
        %v263 = vadd.s32 %v261, %v262
        %vm264 = vcmp.eq.s32.totalorder %v253, 1
        %v265 = vsel %vm264, 1, 0
        %v266 = vsel %vm256, %v265, 0
        %v267 = vrot.slane %v266, 4
        %v268 = vadd.s32 %v266, %v267
        %v269 = vrot.slane %v268, 2
        %v270 = vadd.s32 %v268, %v269
        %v271 = vrot.slane %v270, 1
        %v272 = vadd.s32 %v270, %v271
        %vm273 = vcmp.eq.s32.totalorder %v253, 2
        %v274 = vsel %vm273, 1, 0
        %v275 = vsel %vm256, %v274, 0
        %v276 = vrot.slane %v275, 4
        %v277 = vadd.s32 %v275, %v276
        %v278 = vrot.slane %v277, 2
        %v279 = vadd.s32 %v277, %v278
        %v280 = vrot.slane %v279, 1
        %v281 = vadd.s32 %v279, %v280
        %vm282 = vcmp.eq.s32.totalorder %v253, 3
        %v283 = vsel %vm282, 1, 0
        %v284 = vsel %vm256, %v283, 0
        %v285 = vrot.slane %v284, 4
        %v286 = vadd.s32 %v284, %v285
        %v287 = vrot.slane %v286, 2
        %v288 = vadd.s32 %v286, %v287
        %v289 = vrot.slane %v288, 1
        %v290 = vadd.s32 %v288, %v289
        %vm291 = vcmp.eq.s32.totalorder %v253, 4
        %v292 = vsel %vm291, 1, 0
        %v293 = vsel %vm256, %v292, 0
        %v294 = vrot.slane %v293, 4
        %v295 = vadd.s32 %v293, %v294
        %v296 = vrot.slane %v295, 2
        %v297 = vadd.s32 %v295, %v296
        %v298 = vrot.slane %v297, 1
        %v299 = vadd.s32 %v297, %v298
        %vm300 = vcmp.eq.s32.totalorder %v253, 5
        %v301 = vsel %vm300, 1, 0
        %v302 = vsel %vm256, %v301, 0
        %v303 = vrot.slane %v302, 4
        %v304 = vadd.s32 %v302, %v303
        %v305 = vrot.slane %v304, 2
        %v306 = vadd.s32 %v304, %v305
        %v307 = vrot.slane %v306, 1
        %v308 = vadd.s32 %v306, %v307
        %vm309 = vcmp.eq.s32.totalorder %v253, 6
        %v310 = vsel %vm309, 1, 0
        %v311 = vsel %vm256, %v310, 0
        %v312 = vrot.slane %v311, 4
        %v313 = vadd.s32 %v311, %v312
        %v314 = vrot.slane %v313, 2
        %v315 = vadd.s32 %v313, %v314
        %v316 = vrot.slane %v315, 1
        %v317 = vadd.s32 %v315, %v316
        %vm318 = vcmp.eq.s32.totalorder %v253, 7
        %v319 = vsel %vm318, 1, 0
        %v320 = vsel %vm256, %v319, 0
        %v321 = vrot.slane %v320, 4
        %v322 = vadd.s32 %v320, %v321
        %v323 = vrot.slane %v322, 2
        %v324 = vadd.s32 %v322, %v323
        %v325 = vrot.slane %v324, 1
        %v326 = vadd.s32 %v324, %v325
        %vm327 = vcmp.eq.s32.totalorder %v253, 8
        %v328 = vsel %vm327, 1, 0
        %v329 = vsel %vm256, %v328, 0
        %v330 = vrot.slane %v329, 4
        %v331 = vadd.s32 %v329, %v330
        %v332 = vrot.slane %v331, 2
        %v333 = vadd.s32 %v331, %v332
        %v334 = vrot.slane %v333, 1
        %v335 = vadd.s32 %v333, %v334
        %vm336 = vcmp.eq.s32.totalorder %v253, 9
        %v337 = vsel %vm336, 1, 0
        %v338 = vsel %vm256, %v337, 0
        %v339 = vrot.slane %v338, 4
        %v340 = vadd.s32 %v338, %v339
        %v341 = vrot.slane %v340, 2
        %v342 = vadd.s32 %v340, %v341
        %v343 = vrot.slane %v342, 1
        %v344 = vadd.s32 %v342, %v343
        %vm345 = vcmp.eq.s32.totalorder %v253, 10
        %v346 = vsel %vm345, 1, 0
        %v347 = vsel %vm256, %v346, 0
        %v348 = vrot.slane %v347, 4
        %v349 = vadd.s32 %v347, %v348
        %v350 = vrot.slane %v349, 2
        %v351 = vadd.s32 %v349, %v350
        %v352 = vrot.slane %v351, 1
        %v353 = vadd.s32 %v351, %v352
        %vm354 = vcmp.eq.s32.totalorder %v253, 11
        %v355 = vsel %vm354, 1, 0
        %v356 = vsel %vm256, %v355, 0
        %v357 = vrot.slane %v356, 4
        %v358 = vadd.s32 %v356, %v357
        %v359 = vrot.slane %v358, 2
        %v360 = vadd.s32 %v358, %v359
        %v361 = vrot.slane %v360, 1
        %v362 = vadd.s32 %v360, %v361
        %vm363 = vcmp.eq.s32.totalorder %v253, 12
        %v364 = vsel %vm363, 1, 0
        %v365 = vsel %vm256, %v364, 0
        %v366 = vrot.slane %v365, 4
        %v367 = vadd.s32 %v365, %v366
        %v368 = vrot.slane %v367, 2
        %v369 = vadd.s32 %v367, %v368
        %v370 = vrot.slane %v369, 1
        %v371 = vadd.s32 %v369, %v370
        %vm372 = vcmp.eq.s32.totalorder %v253, 13
        %v373 = vsel %vm372, 1, 0
        %v374 = vsel %vm256, %v373, 0
        %v375 = vrot.slane %v374, 4
        %v376 = vadd.s32 %v374, %v375
        %v377 = vrot.slane %v376, 2
        %v378 = vadd.s32 %v376, %v377
        %v379 = vrot.slane %v378, 1
        %v380 = vadd.s32 %v378, %v379
        %vm381 = vcmp.eq.s32.totalorder %v253, 14
        %v382 = vsel %vm381, 1, 0
        %v383 = vsel %vm256, %v382, 0
        %v384 = vrot.slane %v383, 4
        %v385 = vadd.s32 %v383, %v384
        %v386 = vrot.slane %v385, 2
        %v387 = vadd.s32 %v385, %v386
        %v388 = vrot.slane %v387, 1
        %v389 = vadd.s32 %v387, %v388
        %vm390 = vcmp.eq.s32.totalorder %v253, 15
        %v391 = vsel %vm390, 1, 0
        %v392 = vsel %vm256, %v391, 0
        %v393 = vrot.slane %v392, 4
        %v394 = vadd.s32 %v392, %v393
        %v395 = vrot.slane %v394, 2
        %v396 = vadd.s32 %v394, %v395
        %v397 = vrot.slane %v396, 1
        %v398 = vadd.s32 %v396, %v397
        %vm399 = vcmask 1040384
        %v400 = vsel %vm399, %v263, %v272
        %vm401 = vcmask 1041408
        %v402 = vsel %vm401, %v400, %v281
        %vm403 = vcmask 1042432
        %v404 = vsel %vm403, %v402, %v290
        %v405 = vsel %vm256, %v404, %v299
        %vm406 = vcmask 1044480
        %v407 = vsel %vm406, %v405, %v308
        %vm408 = vcmask 1045504
        %v409 = vsel %vm408, %v407, %v317
        %vm410 = vcmask 1046528
        %v411 = vsel %vm410, %v409, %v326
        %v412 = vsel %vm399, %v335, %v344
        %v413 = vsel %vm401, %v412, %v353
        %v414 = vsel %vm403, %v413, %v362
        %v415 = vsel %vm256, %v414, %v371
        %v416 = vsel %vm406, %v415, %v380
        %v417 = vsel %vm408, %v416, %v389
        %v418 = vsel %vm410, %v417, %v398
        %v419 = vld [vmem:[%s225] sm:$0xff]
        %v420 = vld [vmem:[%s225 + $0x8] sm:$0xff]
        %v421 = vadd.s32 %v419, %v411
        %v422 = vadd.s32 %v420, %v418
        %423 = vst [vmem:[%s225] sm:$0xff] %v421
        %424 = vst [vmem:[%s225 + $0x8] sm:$0xff] %v422
        %s425 = sand.u32 %s106, 1
        %s426 = scalar_lea.sflag [#allocation4], %s425
        %s427 = sand.u32 %s106, 1
        %s428 = smul.addr %s427, 16
        %s429 = scalar_lea.vmem [#allocation7], %s428
        // Predicated region
        $region41: #{tpu_custom_call.1} parent=27 // pred_check
          %p430 = pneg %p116
        $region42: #{tpu_custom_call.1} parent=27 // pred_check_branch
          %432 = sbr.rel (%p430) target = $region44
        $region43: #{tpu_custom_call.1} parent=27 // pred_region
          %s434 = ssub.s32 256, 256
          %435 = vsyncadd %s426, %s434
          %s436 = smul.addr %s26, 2
          %s437 = smul.addr %s436, 128
          %s438 = scalar_lea.hbm %s2, %s437
          %s439 = sshll.u32 %s429, 4
          %s440 = int_to_ptr.vmem [resolvable:$true] %s439
          %445 = dma.vmem_to_hbm [thread:$0]  %s440, 256, %s438, %s426, 128, 128, 8
        $region44: #{tpu_custom_call.1} parent=27 // pred_fallthru
          _
      $region28: #{tpu_custom_call.1} parent=5 // pred_fallthru
        _
      %p446 = scmp.le.s32.totalorder 2, %s17
      // Predicated region
      $region45: #{tpu_custom_call.1} parent=5 // pred_check
        %p447 = pneg %p446
      $region46: #{tpu_custom_call.1} parent=5 // pred_check_branch
        %449 = sbr.rel (%p447) target = $region48
      $region47: #{tpu_custom_call.1} parent=5 // pred_region
        %s450 = ssub.s32 %s17, 2
        // Predicated region
        $region49: #{tpu_custom_call.1} parent=47 // pred_check
          %p451 = pneg %p122
        $region50: #{tpu_custom_call.1} parent=47 // pred_check_branch
          %453 = sbr.rel (%p451) target = $region52
        $region51: #{tpu_custom_call.1} parent=47 // pred_region
          %s454 = sand.u32 %s107, 1
          %s455 = scalar_lea.sflag [#allocation4], %s454
          %s456 = sand.u32 %s107, 1
          %s457 = smul.addr %s456, 16
          %s458 = scalar_lea.vmem [#allocation7], %s457
          %459 = dma.done %s455, 256
        $region52: #{tpu_custom_call.1} parent=47 // pred_fallthru
          _
      $region48: #{tpu_custom_call.1} parent=5 // pred_fallthru
        _
    $region6: #{tpu_custom_call.1} parent=1 // loop_footer
      %s21 = sadd.s32 1, %s17
    $region7: #{tpu_custom_call.1} parent=1 // loop_footer_branch
      %16 = sbr.rel target = $region3
    $region8: #{tpu_custom_call.1} parent=1 // loop_exit
      _
    %460 = vsyncpa [#allocation3], 1
    %s461 = scalar_lea.sflag [#allocation3], 1
    %462 = vsyncpa %s461, 1
    %463 = vsyncpa [#allocation6], 1
    %s464 = scalar_lea.sflag [#allocation6], 1
    %465 = vsyncpa %s464, 1
    %466 = vsyncpa [#allocation4], 1
    %s467 = scalar_lea.sflag [#allocation4], 1
    %468 = vsyncpa %s467, 1

</llo_original>
